<compile_context>
chip_gen: v6e
topology: v6e:2x2x1
jax: 0.10.0
libtpu: 0.0.40
codegen_flags: <defaults>
</compile_context>

<pallas_src>
import functools

import jax
import jax.numpy as jnp
from jax.experimental import pallas as pl
from jax.experimental.pallas import tpu as pltpu


# ---------------------------------------------------------------------------
# Kernel: pure VPU elementwise work + two XLU lane rotates per block.
#   cos_ref / sin_ref : (TS, D)      coefficient tables (f32 or bf16)
#   x_ref   / out_ref : (TB, TS, D)  activations (native dtype)
# out = x * cos + pairswap(x) * sin_signed, where pairswap swaps adjacent
# even/odd lanes.  Rotate wrap-around only ever lands on lanes the parity
# select discards, so the wrap is harmless.
# ---------------------------------------------------------------------------
def rope_kernel(cos_ref, sin_ref, x_ref, out_ref, *, shift_next, shift_prev):
    x = x_ref[...].astype(jnp.float32)
    cos = cos_ref[...].astype(jnp.float32)
    sin = sin_ref[...].astype(jnp.float32)

    # Lane-parity mask (even lanes take x[j+1], odd lanes take x[j-1]).
    lane = jax.lax.broadcasted_iota(jnp.int32, x.shape, 2)
    is_even = (lane & 1) == 0

    # Accumulate so only one rolled temporary is live at a time.
    # pltpu.roll follows the jnp.roll convention: roll(x, 1)[j] == x[j-1].
    out = x * cos
    x_next = pltpu.roll(x, shift_next, axis=2)          # x_next[j] = x[j+1]
    out = out + jnp.where(is_even, x_next, 0.0) * sin
    x_prev = pltpu.roll(x, shift_prev, axis=2)          # x_prev[j] = x[j-1]
    out = out + jnp.where(is_even, 0.0, x_prev) * sin

    out_ref[...] = out.astype(out_ref.dtype)


def _choose_tiles(B, S, D, itemsize):
    """Pick (TB, TS).

    Budgets in elements so in-kernel f32 temporaries stay bounded regardless of
    the activation dtype; keeps (x + out blocks)*2 pipeline buffers + 2 tables
    + temporaries comfortably under the explicit 32 MiB scoped-VMEM limit (safe
    on v5e/v6e/v7x).  Also guarantees >= 2 (ideally >= 4) grid blocks whenever
    the problem is bigger than a single small block, so dual-TC chips (v7x) /
    megacore get parallel work.
    """
    X_BLOCK_ELEMS = 512 * 1024           # ~2 MiB f32 / ~1 MiB bf16 of x per block
    TAB_BLOCK_BYTES = 1 * 1024 * 1024    # both table blocks, f32 worst case
    sub = 8 * max(1, 4 // max(1, itemsize))   # sublane quantum: 8 (f32) / 16 (bf16)

    target_rows = max(1, X_BLOCK_ELEMS // max(1, D))
    ts_cap = max(sub, min(TAB_BLOCK_BYTES // max(1, 2 * D * 4), target_rows))
    if S <= ts_cap:
        TS = S                                  # full seq extent (any size allowed)
    else:
        TS = max(sub, (ts_cap // sub) * sub)    # second-to-last dim: quantum multiple
    TB = max(1, min(B, target_rows // max(1, TS)))

    total_bytes = B * S * D * itemsize
    if total_bytes > X_BLOCK_ELEMS * itemsize:
        min_blocks = 4
    elif total_bytes > 256 * 1024:
        min_blocks = 2
    else:
        min_blocks = 1

    def nblocks(tb, ts):
        return ((S + ts - 1) // ts) * ((B + tb - 1) // tb)

    while nblocks(TB, TS) < min_blocks and TB > 1:
        TB = (TB + 1) // 2
    while nblocks(TB, TS) < min_blocks and TS > sub:
        new_ts = max(sub, ((TS // 2 + sub - 1) // sub) * sub)
        if new_ts >= TS:
            break
        TS = new_ts
    return TB, TS


class RotaryPositionalEncoding:
    """JAX/Pallas port of the PyTorch RotaryPositionalEncoding module."""

    def __init__(self, d_model, max_len=60):
        if d_model % 2 != 0:
            raise ValueError(
                'd_model must be divisible by 2 for Rotary Positional Encoding.')
        self.d_model = d_model
        self.max_len = max_len
        self.dim_half = d_model // 2
        # Deterministic buffers, identical to the torch __init__.
        self.freqs = 1.0 / (10000.0 ** (
            jnp.arange(0, self.dim_half, dtype=jnp.float32) / self.dim_half))
        self.pos_seq = jnp.arange(max_len, dtype=jnp.float32)
        # Precompute interleave-expanded cos / signed-sin tables up to max_len.
        cos_t, sin_s = self._build_tables(self.pos_seq)
        self._tab_cache = {jnp.float32: (cos_t, sin_s)}

    def _build_tables(self, positions):
        angles = positions[:, None] * self.freqs[None, :]          # (S, Dh)
        cos_t = jnp.repeat(jnp.cos(angles), 2, axis=-1)            # (S, D)
        sin_r = jnp.repeat(jnp.sin(angles), 2, axis=-1)            # (S, D)
        even = (jnp.arange(self.d_model) % 2) == 0
        # Signed sin: coefficient of the pair-swapped x (even lanes get -sin,
        # odd lanes get +sin).
        sin_s = jnp.where(even, -sin_r, sin_r)
        return cos_t.astype(jnp.float32), sin_s.astype(jnp.float32)

    def _tables_for(self, S, x_dtype):
        # bf16 activations -> bf16 tables (halves table HBM bytes); f32 otherwise.
        tab_dtype = jnp.bfloat16 if x_dtype == jnp.bfloat16 else jnp.float32
        if S > self.max_len:
            # TODO(synk): torch module emits logging.warning here; we just recompute.
            cos_t, sin_s = self._build_tables(jnp.arange(S, dtype=jnp.float32))
            return cos_t.astype(tab_dtype), sin_s.astype(tab_dtype)
        if tab_dtype not in self._tab_cache:
            cos_f32, sin_f32 = self._tab_cache[jnp.float32]
            self._tab_cache[tab_dtype] = (cos_f32.astype(tab_dtype),
                                          sin_f32.astype(tab_dtype))
        cos_t, sin_s = self._tab_cache[tab_dtype]
        return cos_t[:S], sin_s[:S]

    def __call__(self, x, *, donate=False):
        B, S, D = x.shape
        if D != self.d_model:
            raise ValueError(f'last dim {D} != d_model {self.d_model}')
        cos_t, sin_s = self._tables_for(S, x.dtype)

        # Lane-dense view: if d_model < 128 and shapes allow it, fold sequence
        # rows into the 128-lane dim (contiguous reshape; pairs never straddle
        # a 128-lane boundary since D | 128).
        x_view, cos_v, sin_v = x, cos_t, sin_s
        Sv, Dv = S, D
        if D < 128 and (128 % D == 0) and ((S * D) % 128 == 0):
            Dv = 128
            Sv = (S * D) // 128
            x_view = x.reshape(B, Sv, Dv)
            cos_v = cos_t.reshape(Sv, Dv)
            sin_v = sin_s.reshape(Sv, Dv)

        TB, TS = _choose_tiles(B, Sv, Dv, x.dtype.itemsize)
        # B-tiles innermost: the (TS, Dv) table blocks keep the same block index
        # across the inner loop, so their DMAs are not re-issued every step.
        grid = (pl.cdiv(Sv, TS), pl.cdiv(B, TB))

        kernel = functools.partial(rope_kernel, shift_next=Dv - 1, shift_prev=1)

        out = pl.pallas_call(
            kernel,
            out_shape=jax.ShapeDtypeStruct((B, Sv, Dv), x.dtype),
            grid=grid,
            in_specs=[
                pl.BlockSpec((TS, Dv), lambda si, bi: (si, 0)),
                pl.BlockSpec((TS, Dv), lambda si, bi: (si, 0)),
                pl.BlockSpec((TB, TS, Dv), lambda si, bi: (bi, si, 0)),
            ],
            out_specs=pl.BlockSpec((TB, TS, Dv), lambda si, bi: (bi, si, 0)),
            # Only alias x->out when the caller guarantees donation; otherwise
            # XLA would insert a defensive full copy of x (doubles HBM traffic).
            input_output_aliases={2: 0} if donate else {},
            compiler_params=pltpu.CompilerParams(
                dimension_semantics=("parallel", "parallel"),
                vmem_limit_bytes=32 * 1024 * 1024),
        )(cos_v, sin_v, x_view)

        return out.reshape(B, S, D) if (Sv, Dv) != (S, D) else out


def _reference_rope(x, freqs, pos_seq):
    """Pure-JAX reference mirroring the torch forward exactly."""
    S = x.shape[1]
    if S > pos_seq.shape[0]:
        positions = jnp.arange(S, dtype=jnp.float32)[None, :]
    else:
        positions = pos_seq[:S][None, :]
    angles = positions[..., None] * freqs[None, None, :]            # (1, S, Dh)
    sin_a, cos_a = jnp.sin(angles), jnp.cos(angles)
    x_even, x_odd = x[..., 0::2], x[..., 1::2]
    even_rot = x_even * cos_a - x_odd * sin_a
    odd_rot = x_even * sin_a + x_odd * cos_a
    out = jnp.zeros_like(x)
    out = out.at[..., 0::2].set(even_rot)
    out = out.at[..., 1::2].set(odd_rot)
    return out


if __name__ == "__main__":
    # Case 1: primary small test (lane-dense d_model = 128).
    B, S, D = 2, 16, 128
    x = jax.random.normal(jax.random.PRNGKey(0), (B, S, D), dtype=jnp.float32)
    rope = RotaryPositionalEncoding(d_model=D, max_len=60)
    ref = _reference_rope(x, rope.freqs, rope.pos_seq)
    out = jax.block_until_ready(rope(x))
    assert out.shape == (B, S, D) and out.dtype == x.dtype
    assert jnp.allclose(out, ref, atol=1e-5, rtol=1e-5)

    # Case 2: bf16 activations (bf16 tables, f32 math in-kernel, cast at store).
    x2 = jax.random.normal(jax.random.PRNGKey(1), (2, 8, D), dtype=jnp.bfloat16)
    ref2 = _reference_rope(x2.astype(jnp.float32), rope.freqs, rope.pos_seq)
    out2 = jax.block_until_ready(rope(x2))
    assert out2.dtype == jnp.bfloat16
    assert jnp.allclose(out2.astype(jnp.float32), ref2, atol=1e-1, rtol=1e-1)

    # Case 3: d_model < 128 -> folded lane-dense path.
    B3, S3, D3 = 2, 16, 64
    x3 = jax.random.normal(jax.random.PRNGKey(2), (B3, S3, D3), dtype=jnp.float32)
    rope3 = RotaryPositionalEncoding(d_model=D3, max_len=60)
    ref3 = _reference_rope(x3, rope3.freqs, rope3.pos_seq)
    out3 = jax.block_until_ready(rope3(x3))
    assert jnp.allclose(out3, ref3, atol=1e-5, rtol=1e-5)

    # Case 4: seq_len > max_len (recompute path) + multi-block grid with a
    # partial batch tile (exercises the >=2-blocks-per-chip split).
    B4, S4, D4 = 3, 300, 128
    x4 = jax.random.normal(jax.random.PRNGKey(3), (B4, S4, D4), dtype=jnp.float32)
    ref4 = _reference_rope(x4, rope.freqs, rope.pos_seq)
    out4 = jax.block_until_ready(rope(x4))
    assert jnp.allclose(out4, ref4, atol=1e-5, rtol=1e-5)

    print("KERNEL_OK")
</pallas_src>

<mosaic_0001>
module attributes {stable_mosaic.version = 11 : i64} {
  func.func @rope_kernel(%arg0: i32, %arg1: i32, %arg2: memref<16x128xf32, #tpu.memory_space<vmem>>, %arg3: memref<16x128xf32, #tpu.memory_space<vmem>>, %arg4: memref<2x16x128xf32, #tpu.memory_space<vmem>>, %arg5: memref<2x16x128xf32, #tpu.memory_space<vmem>>) attributes {dimension_semantics = [#tpu.dimension_semantics<parallel>, #tpu.dimension_semantics<parallel>], iteration_bounds = array<i64: 1, 1>, scalar_prefetch = 0 : i64, scratch_operands = 0 : i64, tpu.core_type = #tpu.core_type<tc>, window_params = [{transform_indices = @transform_0, window_bounds = array<i64: 16, 128>}, {transform_indices = @transform_1, window_bounds = array<i64: 16, 128>}, {transform_indices = @transform_2, window_bounds = array<i64: 2, 16, 128>}, {transform_indices = @transform_3, window_bounds = array<i64: 2, 16, 128>}]} {
    %c0 = arith.constant 0 : index
    %c0_0 = arith.constant 0 : index
    %c0_1 = arith.constant 0 : index
    %0 = vector.load %arg4[%c0, %c0_0, %c0_1] : memref<2x16x128xf32, #tpu.memory_space<vmem>>, vector<2x16x128xf32>
    %c0_2 = arith.constant 0 : index
    %c0_3 = arith.constant 0 : index
    %1 = vector.load %arg2[%c0_2, %c0_3] : memref<16x128xf32, #tpu.memory_space<vmem>>, vector<16x128xf32>
    %c0_4 = arith.constant 0 : index
    %c0_5 = arith.constant 0 : index
    %2 = vector.load %arg3[%c0_4, %c0_5] : memref<16x128xf32, #tpu.memory_space<vmem>>, vector<16x128xf32>
    %3 = tpu.iota {dimensions = array<i32: 2>} : vector<2x16x128xi32>
    %c1_i32 = arith.constant 1 : i32
    %4 = vector.broadcast %c1_i32 : i32 to vector<2x16x128xi32>
    %5 = arith.andi %3, %4 : vector<2x16x128xi32>
    %c0_i32 = arith.constant 0 : i32
    %6 = vector.broadcast %c0_i32 : i32 to vector<2x16x128xi32>
    %7 = arith.cmpi eq, %5, %6 : vector<2x16x128xi32>
    %8 = vector.shape_cast %1 : vector<16x128xf32> to vector<1x16x128xf32>
    %9 = vector.broadcast %8 : vector<1x16x128xf32> to vector<2x16x128xf32>
    %10 = arith.mulf %0, %9 : vector<2x16x128xf32>
    %c127_i32 = arith.constant 127 : i32
    %11 = tpu.dynamic_rotate %0 by %c127_i32 dim 2 : vector<2x16x128xf32>, i32 -> vector<2x16x128xf32>
    %cst = arith.constant 0.000000e+00 : f32
    %12 = vector.broadcast %cst : f32 to vector<2x16x128xf32>
    %13 = arith.select %7, %11, %12 : vector<2x16x128xi1>, vector<2x16x128xf32>
    %14 = vector.shape_cast %2 : vector<16x128xf32> to vector<1x16x128xf32>
    %15 = vector.broadcast %14 : vector<1x16x128xf32> to vector<2x16x128xf32>
    %16 = arith.mulf %13, %15 : vector<2x16x128xf32>
    %17 = arith.addf %10, %16 : vector<2x16x128xf32>
    %c1_i32_6 = arith.constant 1 : i32
    %18 = tpu.dynamic_rotate %0 by %c1_i32_6 dim 2 : vector<2x16x128xf32>, i32 -> vector<2x16x128xf32>
    %cst_7 = arith.constant 0.000000e+00 : f32
    %19 = vector.broadcast %cst_7 : f32 to vector<2x16x128xf32>
    %20 = arith.select %7, %19, %18 : vector<2x16x128xi1>, vector<2x16x128xf32>
    %21 = vector.shape_cast %2 : vector<16x128xf32> to vector<1x16x128xf32>
    %22 = vector.broadcast %21 : vector<1x16x128xf32> to vector<2x16x128xf32>
    %23 = arith.mulf %20, %22 : vector<2x16x128xf32>
    %24 = arith.addf %17, %23 : vector<2x16x128xf32>
    %c0_8 = arith.constant 0 : index
    %c0_9 = arith.constant 0 : index
    %c0_10 = arith.constant 0 : index
    %25 = vector.load %arg5[%c0_8, %c0_9, %c0_10] : memref<2x16x128xf32, #tpu.memory_space<vmem>>, vector<2x16x128xf32>
    tpu.vector_store %arg5[%c0_8, %c0_9, %c0_10], %24 {strides = array<i32>} : memref<2x16x128xf32, #tpu.memory_space<vmem>>, vector<2x16x128xf32>,
    return
  }
  func.func @transform_0(%arg0: i32, %arg1: i32) -> (i32, i32) {
    %c0_i32 = arith.constant 0 : i32
    %c0_i32_0 = arith.constant 0 : i32
    return %arg0, %c0_i32 : i32, i32
  }
  func.func @transform_1(%arg0: i32, %arg1: i32) -> (i32, i32) {
    %c0_i32 = arith.constant 0 : i32
    %c0_i32_0 = arith.constant 0 : i32
    return %arg0, %c0_i32 : i32, i32
  }
  func.func @transform_2(%arg0: i32, %arg1: i32) -> (i32, i32, i32) {
    %c0_i32 = arith.constant 0 : i32
    %c0_i32_0 = arith.constant 0 : i32
    return %arg1, %arg0, %c0_i32 : i32, i32, i32
  }
  func.func @transform_3(%arg0: i32, %arg1: i32) -> (i32, i32, i32) {
    %c0_i32 = arith.constant 0 : i32
    %c0_i32_0 = arith.constant 0 : i32
    return %arg1, %arg0, %c0_i32 : i32, i32, i32
  }
}

</mosaic_0001>

<llo_original>
// kernel: tpu_custom_call.1
$region0: #{tpu_custom_call.1}
  #allocation0 [shape = 'u32[]', space=smem, size = 0x4, offset = 0x4, fixed_abs, tag = 'smem constant byte address 0x4 - core index']
  #allocation1 [shape = 'u32[144,128]{1,0:T(1,128)}', space=vmem, size = 0x12000, scoped, tag = 'internal scratch']
  %s0 = inlined_call_operand.hbm [shape: f32[16,128], index: 0, kind: input, shape index: {}]
  %s1 = inlined_call_operand.hbm [shape: f32[16,128], index: 1, kind: input, shape index: {}]
  %s2 = inlined_call_operand.hbm [shape: f32[2,16,128], index: 2, kind: input, shape index: {}]
  %s3 = inlined_call_operand.hbm [shape: f32[2,16,128], index: 3, kind: output, shape index: {}]
  %s4 = sld [smem:[#allocation0]]
  $region34: #{tpu_custom_call.1} parent=0
    _
  %s6 = ssub.s32 1, %s4
  %s7 = scalar_select 0, %s6, %s4
  $region1: #{tpu_custom_call.1} parent=0
    #allocation2 [shape = 'u8[8192]{0}', space=vmem, size = 0x2000, scoped, tag = 'input window, operand 0, single buffered']
    #allocation3 [shape = 's32[1]{0}', space=sflag, size = 0x4, scoped, tag = 'scoped memory for tpu_custom_call.1']
    #allocation4 [shape = 's32[1]{0}', space=sflag, size = 0x4, scoped, tag = 'scoped memory for tpu_custom_call.1']
    #allocation5 [shape = 'u8[8192]{0}', space=vmem, size = 0x2000, scoped, tag = 'input window, operand 1, single buffered']
    #allocation6 [shape = 's32[1]{0}', space=sflag, size = 0x4, scoped, tag = 'scoped memory for tpu_custom_call.1']
    #allocation7 [shape = 'u8[16384]{0}', space=vmem, size = 0x4000, scoped, tag = 'input window, operand 2, single buffered']
    #allocation8 [shape = 'u8[16384]{0}', space=vmem, size = 0x4000, scoped, tag = 'output window, operand 0, single buffered']
    %8 = vsyncpa [#allocation3], 0
    %9 = vsyncpa [#allocation6], 0
    %10 = vsyncpa [#allocation4], 0
    // Predicated region
    $region2: #{tpu_custom_call.1} parent=1 // pred_check
      _
    $region3: #{tpu_custom_call.1} parent=1 // pred_check_branch
      %12 = sbr.rel (0) target = $region5
    $region4: #{tpu_custom_call.1} parent=1 // pred_region
      %s14 = ssub.s32 256, 256
      %15 = vsyncadd [#allocation3], %s14
      %s16 = sshll.u32 [#allocation2], 4
      %s17 = int_to_ptr.vmem [resolvable:$true] %s16
      %22 = dma.hbm_to_vmem [thread:$0]  %s0, 256, %s17, [#allocation3], 128, 128, 8
    $region5: #{tpu_custom_call.1} parent=1 // pred_fallthru
      _
    // Predicated region
    $region6: #{tpu_custom_call.1} parent=1 // pred_check
      _
    $region7: #{tpu_custom_call.1} parent=1 // pred_check_branch
      %24 = sbr.rel (0) target = $region9
    $region8: #{tpu_custom_call.1} parent=1 // pred_region
      %s26 = ssub.s32 256, 256
      %27 = vsyncadd [#allocation6], %s26
      %s28 = sshll.u32 [#allocation5], 4
      %s29 = int_to_ptr.vmem [resolvable:$true] %s28
      %34 = dma.hbm_to_vmem [thread:$0]  %s1, 256, %s29, [#allocation6], 128, 128, 8
    $region9: #{tpu_custom_call.1} parent=1 // pred_fallthru
      _
    // Predicated region
    $region10: #{tpu_custom_call.1} parent=1 // pred_check
      _
    $region11: #{tpu_custom_call.1} parent=1 // pred_check_branch
      %36 = sbr.rel (0) target = $region13
    $region12: #{tpu_custom_call.1} parent=1 // pred_region
      %s38 = ssub.s32 512, 512
      %39 = vsyncadd [#allocation6], %s38
      %s40 = sshll.u32 [#allocation7], 4
      %s41 = int_to_ptr.vmem [resolvable:$true] %s40
      %46 = dma.hbm_to_vmem [thread:$0]  %s2, 512, %s41, [#allocation6], 128, 128, 8
    $region13: #{tpu_custom_call.1} parent=1 // pred_fallthru
      _
    // Predicated region
    $region14: #{tpu_custom_call.1} parent=1 // pred_check
      _
    $region15: #{tpu_custom_call.1} parent=1 // pred_check_branch
      %48 = sbr.rel (0) target = $region17
    $region16: #{tpu_custom_call.1} parent=1 // pred_region
      %49 = dma.done [#allocation3], 256
    $region17: #{tpu_custom_call.1} parent=1 // pred_fallthru
      _
    // Predicated region
    $region18: #{tpu_custom_call.1} parent=1 // pred_check
      _
    $region19: #{tpu_custom_call.1} parent=1 // pred_check_branch
      %51 = sbr.rel (0) target = $region21
    $region20: #{tpu_custom_call.1} parent=1 // pred_region
      %52 = dma.done [#allocation6], 256
    $region21: #{tpu_custom_call.1} parent=1 // pred_fallthru
      _
    // Predicated region
    $region22: #{tpu_custom_call.1} parent=1 // pred_check
      _
    $region23: #{tpu_custom_call.1} parent=1 // pred_check_branch
      %54 = sbr.rel (0) target = $region25
    $region24: #{tpu_custom_call.1} parent=1 // pred_region
      %55 = dma.done [#allocation6], 512
    $region25: #{tpu_custom_call.1} parent=1 // pred_fallthru
      _
    %v56 = vld [vmem:[#allocation7] sm:$0xff]
    %v57 = vld [vmem:[#allocation7 + $0x8] sm:$0xff]
    %v58 = vld [vmem:[#allocation7 + $0x10] sm:$0xff]
    %v59 = vld [vmem:[#allocation7 + $0x18] sm:$0xff]
    %v60 = vld [vmem:[#allocation2] sm:$0xff]
    %v61 = vld [vmem:[#allocation2 + $0x8] sm:$0xff]
    %v62 = vld [vmem:[#allocation5] sm:$0xff]
    %v63 = vld [vmem:[#allocation5 + $0x8] sm:$0xff]
    %v64 = vlaneseq
    %v65 = vand.u32 %v64, 127
    %v66 = vand.u32 %v65, 1
    %vm67 = vcmp.eq.s32.totalorder %v66, 0
    %v68 = vmul.f32 %v56, %v60
    %v69 = vmul.f32 %v57, %v61
    %v70 = vmul.f32 %v58, %v60
    %v71 = vmul.f32 %v59, %v61
    %72 = vrot.lane.b32.xlu0 %v56, 127
    %v73 = vpop.permute.xlu0 %72
    %74 = vrot.lane.b32.xlu0 %v57, 127
    %v75 = vpop.permute.xlu0 %74
    %76 = vrot.lane.b32.xlu0 %v58, 127
    %v77 = vpop.permute.xlu0 %76
    %78 = vrot.lane.b32.xlu0 %v59, 127
    %v79 = vpop.permute.xlu0 %78
    %v80 = vsel %vm67, %v73, 0.0
    %v81 = vsel %vm67, %v75, 0.0
    %v82 = vsel %vm67, %v77, 0.0
    %v83 = vsel %vm67, %v79, 0.0
    %v84 = vmul.f32 %v80, %v62
    %v85 = vmul.f32 %v81, %v63
    %v86 = vmul.f32 %v82, %v62
    %v87 = vmul.f32 %v83, %v63
    %v88 = vadd.f32 %v68, %v84
    %v89 = vadd.f32 %v69, %v85
    %v90 = vadd.f32 %v70, %v86
    %v91 = vadd.f32 %v71, %v87
    %92 = vrot.lane.b32.xlu0 %v56, 1
    %v93 = vpop.permute.xlu0 %92
    %94 = vrot.lane.b32.xlu0 %v57, 1
    %v95 = vpop.permute.xlu0 %94
    %96 = vrot.lane.b32.xlu0 %v58, 1
    %v97 = vpop.permute.xlu0 %96
    %98 = vrot.lane.b32.xlu0 %v59, 1
    %v99 = vpop.permute.xlu0 %98
    %v100 = vsel %vm67, 0.0, %v93
    %v101 = vsel %vm67, 0.0, %v95
    %v102 = vsel %vm67, 0.0, %v97
    %v103 = vsel %vm67, 0.0, %v99
    %v104 = vmul.f32 %v100, %v62
    %v105 = vmul.f32 %v101, %v63
    %v106 = vmul.f32 %v102, %v62
    %v107 = vmul.f32 %v103, %v63
    %v108 = vadd.f32 %v88, %v104
    %v109 = vadd.f32 %v89, %v105
    %v110 = vadd.f32 %v90, %v106
    %v111 = vadd.f32 %v91, %v107
    %112 = vst [vmem:[#allocation8] sm:$0xff] %v108
    %113 = vst [vmem:[#allocation8 + $0x8] sm:$0xff] %v109
    %114 = vst [vmem:[#allocation8 + $0x10] sm:$0xff] %v110
    %115 = vst [vmem:[#allocation8 + $0x18] sm:$0xff] %v111
    // Predicated region
    $region26: #{tpu_custom_call.1} parent=1 // pred_check
      _
    $region27: #{tpu_custom_call.1} parent=1 // pred_check_branch
      %117 = sbr.rel (0) target = $region29
    $region28: #{tpu_custom_call.1} parent=1 // pred_region
      %s119 = ssub.s32 512, 512
      %120 = vsyncadd [#allocation4], %s119
      %s121 = sshll.u32 [#allocation8], 4
      %s122 = int_to_ptr.vmem [resolvable:$true] %s121
      %127 = dma.vmem_to_hbm [thread:$0]  %s122, 512, %s3, [#allocation4], 128, 128, 8
    $region29: #{tpu_custom_call.1} parent=1 // pred_fallthru
      _
    // Predicated region
    $region30: #{tpu_custom_call.1} parent=1 // pred_check
      _
    $region31: #{tpu_custom_call.1} parent=1 // pred_check_branch
      %129 = sbr.rel (0) target = $region33
    $region32: #{tpu_custom_call.1} parent=1 // pred_region
      %130 = dma.done [#allocation4], 512
    $region33: #{tpu_custom_call.1} parent=1 // pred_fallthru
      _
    %131 = vsyncpa [#allocation3], 1
    %132 = vsyncpa [#allocation6], 1
    %133 = vsyncpa [#allocation4], 1

</llo_original>
